<compile_context>
chip_gen: v7x
topology: tpu7x:2x2x1
jax: 0.10.0
libtpu: 0.0.40
codegen_flags: <defaults>
</compile_context>

<pallas_src>
import jax
import jax.numpy as jnp
from jax.experimental import pallas as pl
from jax.experimental.pallas import tpu as pltpu


# ----------------------------------------------------------------------------
# Kernels
# ----------------------------------------------------------------------------
def _se_kernel_chw(x_ref, w1t_ref, w2t_ref, o_ref):
    """x_ref: (Bb, C, HW) — spatial axis on lanes."""
    hw = x_ref.shape[-1]
    inv_hw = 1.0 / hw

    # ---- Global average pool over the spatial (lane) axis -> (Bb, C) -------
    # Bulk of the sum as lane-aligned VPU adds (cast folded per chunk, multiple
    # independent accumulators), single cross-lane (XLU) reduce at the end.
    if hw % 128 == 0 and hw > 128:
        n_chunks = hw // 128
        n_acc = min(4, n_chunks)
        accs = [x_ref[:, :, k * 128:(k + 1) * 128].astype(jnp.float32)
                for k in range(n_acc)]
        for k in range(n_acc, n_chunks):
            a = k % n_acc
            accs[a] = accs[a] + x_ref[:, :, k * 128:(k + 1) * 128].astype(jnp.float32)
        partial = accs[0]
        for a in accs[1:]:
            partial = partial + a
        y = jnp.sum(partial, axis=-1) * inv_hw                       # (Bb, C)
    else:
        y = jnp.sum(x_ref[...].astype(jnp.float32), axis=-1) * inv_hw

    # ---- fc1 (C -> C//r, no bias) + ReLU, batched over Bb ------------------
    h = jnp.maximum(
        jnp.dot(y, w1t_ref[...], preferred_element_type=jnp.float32), 0.0)

    # ---- fc2 (C//r -> C, no bias) + Sigmoid ---------------------------------
    s = jax.nn.sigmoid(
        jnp.dot(h, w2t_ref[...], preferred_element_type=jnp.float32))  # (Bb, C)

    # ---- Channel-wise rescale; cast folded into this single line only ------
    o_ref[...] = (x_ref[...].astype(jnp.float32) * s[:, :, None]).astype(o_ref.dtype)


def _se_kernel_hwc(x_ref, w1t_ref, w2t_ref, o_ref):
    """x_ref: (Bb, HW, C) — channel axis on lanes (lane-dense stores)."""
    hw = x_ref.shape[1]
    inv_hw = 1.0 / hw

    # Pool over the (sublane) spatial axis; HW is small on this path.
    y = jnp.sum(x_ref[...].astype(jnp.float32), axis=1) * inv_hw     # (Bb, C)

    h = jnp.maximum(
        jnp.dot(y, w1t_ref[...], preferred_element_type=jnp.float32), 0.0)
    s = jax.nn.sigmoid(
        jnp.dot(h, w2t_ref[...], preferred_element_type=jnp.float32))  # (Bb, C)

    # Lane-wise per-channel scale, broadcast over HW (sublanes).
    o_ref[...] = (x_ref[...].astype(jnp.float32) * s[:, None, :]).astype(o_ref.dtype)


# ----------------------------------------------------------------------------
# Wrapper helpers
# ----------------------------------------------------------------------------
def _tpu_params():
    """(vmem_capacity_bytes, tensorcores_per_device) — conservative fallbacks."""
    vmem_bytes = 64 * 1024 * 1024  # v7x-safe default
    num_cores = 1
    try:
        info = pltpu.get_tpu_info()
        vmem_bytes = int(getattr(info, "vmem_capacity_bytes", vmem_bytes))
    except Exception:
        pass
    try:
        kind = jax.devices()[0].device_kind.lower()
        # Only v7x-class chips expose 2 TensorCores to one Pallas kernel;
        # v5e/v6e are single-TC, so don't pay extra grid steps there.
        if "v7" in kind or "7x" in kind:
            num_cores = 2
    except Exception:
        pass
    return vmem_bytes, num_cores


def _pick_batch_block(b, per_elem_tile_bytes, *, num_cores,
                      max_tile_bytes=4 << 20, min_steps_per_core=4):
    """Largest divisor of b whose tile is <= ~4 MiB AND leaves enough grid steps.

    This is an HBM-streaming kernel: pipeline depth (input DMA / compute /
    writeback overlap) matters more than tile size, and ~85% of HBM roofline
    is already reached at 1-4 MiB tiles. Per-step overhead is only ~0.35 us.
    """
    min_total_steps = min(b, min_steps_per_core * num_cores)
    best = 1
    for d in range(1, b + 1):
        if b % d:
            continue
        if d * per_elem_tile_bytes > max_tile_bytes:
            break  # tiles only grow with d
        if (b // d) >= min_total_steps:
            best = d
    return best


def se_block(x_nchw, w1, w2):
    """x_nchw: (B, C, H, W); w1: (C//r, C); w2: (C, C//r) (torch Linear layout)."""
    b, c, h, w = x_nchw.shape
    hw = h * w
    cr = w1.shape[0]

    # One-time wrapper-side transpose so the kernel contracts over C directly.
    w1t = jnp.transpose(w1)   # (C, Cr)
    w2t = jnp.transpose(w2)   # (Cr, C)

    # Layout: put C on lanes when the spatial axis would be badly lane-padded
    # (HW=49/196 ...) and C is lane-sized; otherwise keep spatial on lanes.
    use_hwc = (hw % 128 != 0) and (c >= 128)
    if use_hwc:
        x_flat = jnp.transpose(x_nchw.reshape(b, c, hw), (0, 2, 1))   # (B, HW, C)
        kernel = _se_kernel_hwc
    else:
        x_flat = x_nchw.reshape(b, c, hw)                             # (B, C, HW)
        kernel = _se_kernel_chw

    per_elem_tile_bytes = c * hw * x_flat.dtype.itemsize
    chip_vmem, num_cores = _tpu_params()
    bb = _pick_batch_block(b, per_elem_tile_bytes, num_cores=num_cores)
    # TODO(synk): when B is tiny (grid length 1-2) and a single element is huge,
    # add an inner pltpu.emit_pipeline over HW chunks (chunked pool-accumulate
    # pass + chunked scale/store pass, x in pl.ANY) to restore DMA/compute overlap.

    # VMEM accounting: in + out tiles, double-buffered, resident weights, slack
    # for chunk-sized f32 temps / compiler scratch.
    weights_bytes = (w1t.size * w1t.dtype.itemsize + w2t.size * w2t.dtype.itemsize)
    vmem_needed = 4 * bb * per_elem_tile_bytes + 2 * weights_bytes + (2 << 20)
    vmem_limit = int(min(max(vmem_needed, 16 << 20), max(chip_vmem - (8 << 20), 16 << 20)))

    itemsize = x_flat.dtype.itemsize
    cost = pl.CostEstimate(
        flops=4 * b * c * cr + 2 * b * c * hw,        # two tiny FCs + pool/rescale
        transcendentals=b * c,                        # sigmoid
        bytes_accessed=2 * b * c * hw * itemsize + weights_bytes,
    )

    blk = (bb,) + x_flat.shape[1:]
    out_flat = pl.pallas_call(
        kernel,
        out_shape=jax.ShapeDtypeStruct(x_flat.shape, x_flat.dtype),
        grid_spec=pltpu.PrefetchScalarGridSpec(
            num_scalar_prefetch=0,
            grid=(b // bb,),
            in_specs=[
                pl.BlockSpec(blk, lambda i: (i, 0, 0)),        # x batch block
                pl.BlockSpec((c, cr), lambda i: (0, 0)),       # w1^T (resident)
                pl.BlockSpec((cr, c), lambda i: (0, 0)),       # w2^T (resident)
            ],
            out_specs=pl.BlockSpec(blk, lambda i: (i, 0, 0)),
        ),
        compiler_params=pltpu.CompilerParams(
            dimension_semantics=("parallel",),
            vmem_limit_bytes=vmem_limit,
        ),
        cost_estimate=cost,
    )(x_flat, w1t, w2t)

    if use_hwc:
        return jnp.transpose(out_flat, (0, 2, 1)).reshape(b, c, h, w)
    return out_flat.reshape(b, c, h, w)


def se_block_reference(x_nchw, w1, w2):
    """Pure-JAX reference matching the PyTorch forward exactly."""
    y = jnp.mean(x_nchw, axis=(2, 3))                    # (B, C)
    y = jnp.maximum(y @ w1.T, 0.0)                       # (B, C//r)
    y = jax.nn.sigmoid(y @ w2.T)                         # (B, C)
    return x_nchw * y[:, :, None, None]


if __name__ == "__main__":
    # Shapes consistent with SEBlock(channel=32, reduction=16)
    B, C, H, W = 2, 32, 16, 16
    reduction = 16
    Cr = C // reduction

    key = jax.random.PRNGKey(0)
    kx, k1, k2 = jax.random.split(key, 3)
    x = jax.random.normal(kx, (B, C, H, W), dtype=jnp.float32)
    # Deterministic synthetic weights (nn.Linear-style shapes, no bias)
    w1 = jax.random.normal(k1, (Cr, C), dtype=jnp.float32) * 0.1
    w2 = jax.random.normal(k2, (C, Cr), dtype=jnp.float32) * 0.1

    out = jax.block_until_ready(se_block(x, w1, w2))
    ref = se_block_reference(x, w1, w2)

    assert out.shape == (B, C, H, W)
    assert jnp.allclose(out, ref, atol=1e-5, rtol=1e-5), "mismatch vs reference"

    print("KERNEL_OK")
</pallas_src>

<mosaic_0001>
module attributes {stable_mosaic.version = 11 : i64} {
  func.func @_se_kernel_chw(%arg0: i32, %arg1: memref<1x32x256xf32, #tpu.memory_space<vmem>>, %arg2: memref<32x2xf32, #tpu.memory_space<vmem>>, %arg3: memref<2x32xf32, #tpu.memory_space<vmem>>, %arg4: memref<1x32x256xf32, #tpu.memory_space<vmem>>) attributes {dimension_semantics = [#tpu.dimension_semantics<parallel>], iteration_bounds = array<i64: 2>, scalar_prefetch = 0 : i64, scratch_operands = 0 : i64, tpu.core_type = #tpu.core_type<tc>, window_params = [{transform_indices = @transform_0, window_bounds = array<i64: 1, 32, 256>}, {pipeline_mode = #tpu.pipeline_mode<synchronous>, transform_indices = @transform_1, window_bounds = array<i64: 32, 2>}, {pipeline_mode = #tpu.pipeline_mode<synchronous>, transform_indices = @transform_2, window_bounds = array<i64: 2, 32>}, {transform_indices = @transform_3, window_bounds = array<i64: 1, 32, 256>}]} {
    %c0 = arith.constant 0 : index
    %c0_0 = arith.constant 0 : index
    %c0_1 = arith.constant 0 : index
    %0 = vector.load %arg1[%c0, %c0_0, %c0_1] : memref<1x32x256xf32, #tpu.memory_space<vmem>>, vector<1x32x128xf32>
    %c0_2 = arith.constant 0 : index
    %c0_3 = arith.constant 0 : index
    %c128 = arith.constant 128 : index
    %1 = vector.load %arg1[%c0_2, %c0_3, %c128] : memref<1x32x256xf32, #tpu.memory_space<vmem>>, vector<1x32x128xf32>
    %2 = arith.addf %0, %1 : vector<1x32x128xf32>
    %cst = arith.constant dense<0.000000e+00> : vector<1x32xf32>
    %3 = vector.multi_reduction <add>, %2, %cst [2] : vector<1x32x128xf32> to vector<1x32xf32>
    %cst_4 = arith.constant 3.906250e-03 : f32
    %4 = vector.broadcast %cst_4 : f32 to vector<1x32xf32>
    %5 = arith.mulf %3, %4 : vector<1x32xf32>
    %c0_5 = arith.constant 0 : index
    %c0_6 = arith.constant 0 : index
    %6 = vector.load %arg2[%c0_5, %c0_6] : memref<32x2xf32, #tpu.memory_space<vmem>>, vector<32x2xf32>
    %cst_7 = arith.constant dense<0.000000e+00> : vector<1x2xf32>
    %7 = tpu.matmul %5, %6, %cst_7 {dimension_numbers = #tpu.dot_dimension_numbers<[1], [0], [0], [1], [0, 0, 1, 1], [], []>} : vector<1x32xf32>, vector<32x2xf32>, vector<1x2xf32> -> vector<1x2xf32>
    %cst_8 = arith.constant 0.000000e+00 : f32
    %8 = vector.broadcast %cst_8 : f32 to vector<1x2xf32>
    %9 = arith.maximumf %7, %8 : vector<1x2xf32>
    %c0_9 = arith.constant 0 : index
    %c0_10 = arith.constant 0 : index
    %10 = vector.load %arg3[%c0_9, %c0_10] : memref<2x32xf32, #tpu.memory_space<vmem>>, vector<2x32xf32>
    %cst_11 = arith.constant dense<0.000000e+00> : vector<1x32xf32>
    %11 = tpu.matmul %9, %10, %cst_11 {dimension_numbers = #tpu.dot_dimension_numbers<[1], [0], [0], [1], [0, 0, 1, 1], [], []>} : vector<1x2xf32>, vector<2x32xf32>, vector<1x32xf32> -> vector<1x32xf32>
    %12 = arith.negf %11 : vector<1x32xf32>
    %13 = math.exp %12 : vector<1x32xf32>
    %cst_12 = arith.constant 1.000000e+00 : f32
    %14 = vector.broadcast %cst_12 : f32 to vector<1x32xf32>
    %15 = arith.addf %14, %13 : vector<1x32xf32>
    %16 = arith.divf %14, %15 : vector<1x32xf32>
    %c0_13 = arith.constant 0 : index
    %c0_14 = arith.constant 0 : index
    %c0_15 = arith.constant 0 : index
    %17 = vector.load %arg1[%c0_13, %c0_14, %c0_15] : memref<1x32x256xf32, #tpu.memory_space<vmem>>, vector<1x32x256xf32>
    %18 = vector.shape_cast %16 : vector<1x32xf32> to vector<1x32x1xf32>
    %19 = vector.broadcast %18 : vector<1x32x1xf32> to vector<1x32x256xf32>
    %20 = arith.mulf %17, %19 : vector<1x32x256xf32>
    %c0_16 = arith.constant 0 : index
    %c0_17 = arith.constant 0 : index
    %c0_18 = arith.constant 0 : index
    %21 = vector.load %arg4[%c0_16, %c0_17, %c0_18] : memref<1x32x256xf32, #tpu.memory_space<vmem>>, vector<1x32x256xf32>
    tpu.vector_store %arg4[%c0_16, %c0_17, %c0_18], %20 {strides = array<i32>} : memref<1x32x256xf32, #tpu.memory_space<vmem>>, vector<1x32x256xf32>,
    return
  }
  func.func @transform_0(%arg0: i32) -> (i32, i32, i32) {
    %c0_i32 = arith.constant 0 : i32
    %c0_i32_0 = arith.constant 0 : i32
    %c0_i32_1 = arith.constant 0 : i32
    return %arg0, %c0_i32, %c0_i32_0 : i32, i32, i32
  }
  func.func @transform_1(%arg0: i32) -> (i32, i32) {
    %c0_i32 = arith.constant 0 : i32
    %c0_i32_0 = arith.constant 0 : i32
    %c0_i32_1 = arith.constant 0 : i32
    return %c0_i32, %c0_i32_0 : i32, i32
  }
  func.func @transform_2(%arg0: i32) -> (i32, i32) {
    %c0_i32 = arith.constant 0 : i32
    %c0_i32_0 = arith.constant 0 : i32
    %c0_i32_1 = arith.constant 0 : i32
    return %c0_i32, %c0_i32_0 : i32, i32
  }
  func.func @transform_3(%arg0: i32) -> (i32, i32, i32) {
    %c0_i32 = arith.constant 0 : i32
    %c0_i32_0 = arith.constant 0 : i32
    %c0_i32_1 = arith.constant 0 : i32
    return %arg0, %c0_i32, %c0_i32_0 : i32, i32, i32
  }
}

</mosaic_0001>

<llo_original>
// kernel: tpu_custom_call.1
$region0: #{tpu_custom_call.1}
  #allocation0 [shape = 'u32[]', space=smem, size = 0x4, offset = 0x4, fixed_abs, tag = 'smem constant byte address 0x4 - core index']
  #allocation1 [shape = 'u32[144,128]{1,0:T(1,128)}', space=vmem, size = 0x12000, scoped, tag = 'internal scratch']
  %s0 = inlined_call_operand.hbm [shape: f32[2,32,256], index: 0, kind: input, shape index: {}]
  %s1 = inlined_call_operand.vmem [shape: f32[32,2], index: 1, kind: input, shape index: {}]
  %s2 = inlined_call_operand.vmem [shape: f32[2,32], index: 2, kind: input, shape index: {}]
  %s3 = inlined_call_operand.hbm [shape: f32[2,32,256], index: 3, kind: output, shape index: {}]
  %s4 = sld [smem:[#allocation0]]
  $region49: #{tpu_custom_call.1} parent=0
    _
  %s6 = ssub.s32 1, %s4
  %s7 = scalar_select 0, %s6, %s4
  $region1: #{tpu_custom_call.1} parent=0
    #allocation2 [shape = 'u8[65536]{0}', space=vmem, size = 0x10000, scoped, tag = 'input window, operand 0']
    #allocation3 [shape = 's32[2]{0}', space=sflag, size = 0x8, scoped, tag = 'scoped memory for tpu_custom_call.1']
    #allocation4 [shape = 's32[2]{0}', space=sflag, size = 0x8, scoped, tag = 'scoped memory for tpu_custom_call.1']
    #allocation5 [shape = 'u8[65536]{0}', space=vmem, size = 0x10000, scoped, tag = 'output window, operand 0']
    %8 = vsyncpa [#allocation3], 0
    %s9 = scalar_lea.sflag [#allocation3], 1
    %10 = vsyncpa %s9, 0
    %11 = vsyncpa [#allocation4], 0
    %s12 = scalar_lea.sflag [#allocation4], 1
    %13 = vsyncpa %s12, 0
    loop: start=0, step=1, limit=4
    $region2: #{tpu_custom_call.1} parent=1 // loop_pre_header
      _
    $region3: #{tpu_custom_call.1} parent=1 // loop_header
      %s15 = sphi 0, %s19
      %p16 = scmp.ge.s32.totalorder %s15, 4
      %s25 = sphi 0, %s27
      %s28 = sphi 0, %s25
      %s29 = sphi 0, %s28
      %s45 = sphi 0, %s29
      %s49 = sphi 0, %s49
      %s51 = sphi 0, %s49
      %s52 = sphi 0, %s51
      %s66 = sphi 0, %s52
      %s70 = sphi 0, %s70
      %s72 = sphi 0, %s70
      %s73 = sphi 0, %s72
      %s87 = sphi 0, %s73
      %s93 = sphi 0, %s95
      %s96 = sphi 0, %s93
      %s97 = sphi 0, %s96
      %s113 = sphi 0, %s97
    $region4: #{tpu_custom_call.1} parent=1 // loop_header_branch
      %18 = sbr.rel (%p16) target = $region8
    $region5: #{tpu_custom_call.1} parent=1 // loop_body
      %s20 = ssub.s32 %s15, 1
      %s21 = ssub.s32 %s15, 2
      %s22 = sadd.s32 %s15, 1
      %s23 = ssub.s32 %s15, %s22
      %p24 = scmp.eq.s32.totalorder %s23, 0
      %s26 = sadd.s32 %s25, 1
      %s27 = scalar_select %p24, %s25, %s26
      %p30 = pneg %p24
      %p31 = scmp.eq.s32.totalorder %s15, 1
      %p32 = por %p30, %p31
      %p33 = scmp.ne.s32.totalorder %s25, %s28
      %p34 = scmp.eq.s32.totalorder %s15, 0
      %p35 = por %p33, %p34
      %p36 = scmp.ne.s32.totalorder %s25, %s28
      %p37 = scmp.eq.s32.totalorder %s20, 1
      %p38 = por %p36, %p37
      %p39 = scmp.ne.s32.totalorder %s28, %s29
      %p40 = scmp.eq.s32.totalorder %s20, 0
      %p41 = por %p39, %p40
      %p42 = scmp.ne.s32.totalorder %s28, %s29
      %p43 = scmp.eq.s32.totalorder %s21, 1
      %p44 = por %p42, %p43
      %p46 = scmp.ne.s32.totalorder %s29, %s45
      %p47 = scmp.eq.s32.totalorder %s21, 0
      %p48 = por %p46, %p47
      %s50 = sadd.s32 %s49, 1
      %p53 = scmp.eq.s32.totalorder %s15, 1
      %p54 = scmp.ne.s32.totalorder %s49, %s51
      %p55 = scmp.eq.s32.totalorder %s15, 0
      %p56 = por %p54, %p55
      %p57 = scmp.ne.s32.totalorder %s49, %s51
      %p58 = scmp.eq.s32.totalorder %s20, 1
      %p59 = por %p57, %p58
      %p60 = scmp.ne.s32.totalorder %s51, %s52
      %p61 = scmp.eq.s32.totalorder %s20, 0
      %p62 = por %p60, %p61
      %p63 = scmp.ne.s32.totalorder %s51, %s52
      %p64 = scmp.eq.s32.totalorder %s21, 1
      %p65 = por %p63, %p64
      %p67 = scmp.ne.s32.totalorder %s52, %s66
      %p68 = scmp.eq.s32.totalorder %s21, 0
      %p69 = por %p67, %p68
      %s71 = sadd.s32 %s70, 1
      %p74 = scmp.eq.s32.totalorder %s15, 1
      %p75 = scmp.ne.s32.totalorder %s70, %s72
      %p76 = scmp.eq.s32.totalorder %s15, 0
      %p77 = por %p75, %p76
      %p78 = scmp.ne.s32.totalorder %s70, %s72
      %p79 = scmp.eq.s32.totalorder %s20, 1
      %p80 = por %p78, %p79
      %p81 = scmp.ne.s32.totalorder %s72, %s73
      %p82 = scmp.eq.s32.totalorder %s20, 0
      %p83 = por %p81, %p82
      %p84 = scmp.ne.s32.totalorder %s72, %s73
      %p85 = scmp.eq.s32.totalorder %s21, 1
      %p86 = por %p84, %p85
      %p88 = scmp.ne.s32.totalorder %s73, %s87
      %p89 = scmp.eq.s32.totalorder %s21, 0
      %p90 = por %p88, %p89
      %s91 = ssub.s32 %s15, %s22
      %p92 = scmp.eq.s32.totalorder %s91, 0
      %s94 = sadd.s32 %s93, 1
      %s95 = scalar_select %p92, %s93, %s94
      %p98 = pneg %p92
      %p99 = scmp.eq.s32.totalorder %s15, 1
      %p100 = por %p98, %p99
      %p101 = scmp.ne.s32.totalorder %s93, %s96
      %p102 = scmp.eq.s32.totalorder %s15, 0
      %p103 = por %p101, %p102
      %p104 = scmp.ne.s32.totalorder %s93, %s96
      %p105 = scmp.eq.s32.totalorder %s20, 1
      %p106 = por %p104, %p105
      %p107 = scmp.ne.s32.totalorder %s96, %s97
      %p108 = scmp.eq.s32.totalorder %s20, 0
      %p109 = por %p107, %p108
      %p110 = scmp.ne.s32.totalorder %s96, %s97
      %p111 = scmp.eq.s32.totalorder %s21, 1
      %p112 = por %p110, %p111
      %p114 = scmp.ne.s32.totalorder %s97, %s113
      %p115 = scmp.eq.s32.totalorder %s21, 0
      %p116 = por %p114, %p115
      %p117 = scmp.le.s32.totalorder 1, %s15
      %p118 = scmp.lt.s32.totalorder %s15, 3
      %p119 = pnand %p117, %p118
      %p120 = pneg %p119
      // Predicated region
      $region9: #{tpu_custom_call.1} parent=5 // pred_check
        _
      $region10: #{tpu_custom_call.1} parent=5 // pred_check_branch
        %122 = sbr.rel (%p119) target = $region12
      $region11: #{tpu_custom_call.1} parent=5 // pred_region
        %s123 = ssub.s32 %s15, 1
        // Predicated region
        $region13: #{tpu_custom_call.1} parent=11 // pred_check
          %p124 = pneg %p62
        $region14: #{tpu_custom_call.1} parent=11 // pred_check_branch
          %126 = sbr.rel (%p124) target = $region16
        $region15: #{tpu_custom_call.1} parent=11 // pred_region
          _
        $region16: #{tpu_custom_call.1} parent=11 // pred_fallthru
          _
        // Predicated region
        $region17: #{tpu_custom_call.1} parent=11 // pred_check
          %p127 = pneg %p83
        $region18: #{tpu_custom_call.1} parent=11 // pred_check_branch
          %129 = sbr.rel (%p127) target = $region20
        $region19: #{tpu_custom_call.1} parent=11 // pred_region
          _
        $region20: #{tpu_custom_call.1} parent=11 // pred_fallthru
          _
      $region12: #{tpu_custom_call.1} parent=5 // pred_fallthru
        _
      %p130 = scmp.lt.s32.totalorder %s15, 2
      // Predicated region
      $region21: #{tpu_custom_call.1} parent=5 // pred_check
        %p131 = pneg %p130
      $region22: #{tpu_custom_call.1} parent=5 // pred_check_branch
        %133 = sbr.rel (%p131) target = $region24
      $region23: #{tpu_custom_call.1} parent=5 // pred_region
        // Predicated region
        $region25: #{tpu_custom_call.1} parent=23 // pred_check
          %p134 = pneg %p35
        $region26: #{tpu_custom_call.1} parent=23 // pred_check_branch
          %136 = sbr.rel (%p134) target = $region28
        $region27: #{tpu_custom_call.1} parent=23 // pred_region
          %s137 = sand.u32 %s25, 1
          %s138 = scalar_lea.sflag [#allocation3], %s137
          %s139 = sand.u32 %s25, 1
          %s140 = smul.addr %s139, 64
          %s141 = scalar_lea.vmem [#allocation2], %s140
          %s143 = ssub.s32 1024, 1024
          %144 = vsyncadd %s138, %s143
          %s145 = smul.addr %s15, 8
          %s146 = smul.addr %s145, 128
          %s147 = scalar_lea.hbm %s0, %s146
          %s148 = sshll.u32 %s141, 4
          %s149 = int_to_ptr.vmem [resolvable:$true] %s148
          %154 = dma.hbm_to_vmem [thread:$0]  %s147, 1024, %s149, %s138, 256, 256, 16
        $region28: #{tpu_custom_call.1} parent=23 // pred_fallthru
          _
      $region24: #{tpu_custom_call.1} parent=5 // pred_fallthru
        _
      %p155 = scmp.le.s32.totalorder 1, %s15
      %p156 = scmp.lt.s32.totalorder %s15, 3
      %p157 = pnand %p155, %p156
      %p158 = pneg %p157
      // Predicated region
      $region29: #{tpu_custom_call.1} parent=5 // pred_check
        _
      $region30: #{tpu_custom_call.1} parent=5 // pred_check_branch
        %160 = sbr.rel (%p157) target = $region32
      $region31: #{tpu_custom_call.1} parent=5 // pred_region
        %s161 = ssub.s32 %s15, 1
        %s162 = sand.u32 %s28, 1
        %s163 = scalar_lea.sflag [#allocation3], %s162
        %s164 = sand.u32 %s28, 1
        %s165 = smul.addr %s164, 64
        %s166 = scalar_lea.vmem [#allocation2], %s165
        // Predicated region
        $region33: #{tpu_custom_call.1} parent=31 // pred_check
          %p167 = pneg %p41
        $region34: #{tpu_custom_call.1} parent=31 // pred_check_branch
          %169 = sbr.rel (%p167) target = $region36
        $region35: #{tpu_custom_call.1} parent=31 // pred_region
          %170 = dma.done %s163, 1024
        $region36: #{tpu_custom_call.1} parent=31 // pred_fallthru
          _
        %s171 = sand.u32 %s28, 1
        %s172 = scalar_lea.sflag [#allocation3], %s171
        %s173 = sand.u32 %s28, 1
        %s174 = smul.addr %s173, 64
        %s175 = scalar_lea.vmem [#allocation2], %s174
        %p176 = pneg %p41
        %p177 = pneg %p38
        %p178 = pneg %p62
        %p179 = pneg %p59
        %p180 = pneg %p83
        %p181 = pneg %p80
        %p182 = pneg %p109
        %p183 = pneg %p106
        %s184 = sand.u32 %s96, 1
        %s185 = scalar_lea.sflag [#allocation4], %s184
        %s186 = sand.u32 %s96, 1
        %s187 = smul.addr %s186, 64
        %s188 = scalar_lea.vmem [#allocation5], %s187
        %v189 = vld [vmem:[%s166] sm:$0xff]
        %v190 = vld [vmem:[%s166 + $0x10] sm:$0xff]
        %v191 = vld [vmem:[%s166 + $0x20] sm:$0xff]
        %v192 = vld [vmem:[%s166 + $0x30] sm:$0xff]
        %v193 = vld [vmem:[%s166 + $0x8] sm:$0xff]
        %v194 = vld [vmem:[%s166 + $0x18] sm:$0xff]
        %v195 = vld [vmem:[%s166 + $0x28] sm:$0xff]
        %v196 = vld [vmem:[%s166 + $0x38] sm:$0xff]
        %v197 = vadd.f32 %v189, %v193
        %v198 = vadd.f32 %v190, %v194
        %v199 = vadd.f32 %v191, %v195
        %v200 = vadd.f32 %v192, %v196
        %201 = vadd.xlane.f32.xlu0 %v197
        %v202 = vpop.xlane.xlu0 %201
        %203 = vadd.xlane.f32.xlu0 %v198
        %v204 = vpop.xlane.xlu0 %203
        %205 = vadd.xlane.f32.xlu0 %v199
        %v206 = vpop.xlane.xlu0 %205
        %207 = vadd.xlane.f32.xlu0 %v200
        %v208 = vpop.xlane.xlu0 %207
        %v209 = vmul.f32 %v202, 0.00390625
        %v210 = vmul.f32 %v204, 0.00390625
        %v211 = vmul.f32 %v206, 0.00390625
        %v212 = vmul.f32 %v208, 0.00390625
        %v213 = vld [vmem:[%s1] sm:$0xff]
        %v214 = vld [vmem:[%s1 + $0x8] sm:$0xff]
        %v215 = vld [vmem:[%s1 + $0x10] sm:$0xff]
        %v216 = vld [vmem:[%s1 + $0x18] sm:$0xff]
        %v221 = vlaneseq
        %v222 = vand.u32 %v221, 127
        %v223 = vlaneseq
        %v224 = vshrl.u32 %v223, 7
        %v225 = vsub.s32 %v222, %v224
        %v226 = vrot.slane %v209, %v225
        %v227 = vadd.s32 %v222, 4294967288
        %v228 = vlaneseq
        %v229 = vshrl.u32 %v228, 7
        %v230 = vsub.s32 %v227, %v229
        %v231 = vrot.slane %v210, %v230
        %vm232 = vcmask 130112
        %v233 = vsel %vm232, %v231, %v226
        %v234 = vadd.s32 %v222, 4294967280
        %v235 = vlaneseq
        %v236 = vshrl.u32 %v235, 7
        %v237 = vsub.s32 %v234, %v236
        %v238 = vrot.slane %v211, %v237
        %vm239 = vcmask 195712
        %v240 = vsel %vm239, %v238, %v233
        %v241 = vadd.s32 %v222, 4294967272
        %v242 = vlaneseq
        %v243 = vshrl.u32 %v242, 7
        %v244 = vsub.s32 %v241, %v243
        %v245 = vrot.slane %v212, %v244
        %vm246 = vcmask 261312
        %v247 = vsel %vm246, %v245, %v240
        %vm248 = vcmask 261120
        %v249 = vsel %vm248, %v247, 0
        %251 = vmatprep.subr.mxu0 0.0
        %252 = vmatpush1.msra.mxu0 %v213
        %253 = vmatprep.subr.mxu0 0.0
        %254 = vmatpush1.msra.mxu0 %v214
        %255 = vmatprep.subr.mxu0 0.0
        %256 = vmatpush1.msra.mxu0 %v215
        %257 = vmatprep.subr.mxu0 0.0
        %258 = vmatpush1.msra.mxu0 %v216
        %259 = vmatprep.subr.mxu0 0.0
        %260 = vmatpush1.msra.mxu0 0.0
        %261 = vmatprep.subr.mxu0 0.0
        %262 = vmatpush1.msra.mxu0 0.0
        %263 = vmatprep.subr.mxu0 0.0
        %264 = vmatpush1.msra.mxu0 0.0
        %265 = vmatprep.subr.mxu0 0.0
        %266 = vmatpush1.msra.mxu0 0.0
        %267 = vmatprep.subr.mxu0 0.0
        %268 = vmatpush1.msra.mxu0 0.0
        %269 = vmatprep.subr.mxu0 0.0
        %270 = vmatpush1.msra.mxu0 0.0
        %271 = vmatprep.subr.mxu0 0.0
        %272 = vmatpush1.msra.mxu0 0.0
        %273 = vmatprep.subr.mxu0 0.0
        %274 = vmatpush1.msra.mxu0 0.0
        %275 = vmatprep.subr.mxu0 0.0
        %276 = vmatpush1.msra.mxu0 0.0
        %277 = vmatprep.subr.mxu0 0.0
        %278 = vmatpush1.msra.mxu0 0.0
        %279 = vmatprep.subr.mxu0 0.0
        %280 = vmatpush1.msra.mxu0 0.0
        %281 = vmatprep.subr.mxu0 0.0
        %282 = vmatpush1.msra.mxu0 0.0
        %283 = vmatprep.subr.mxu0 0.0
        %284 = vmatpush1.msra.mxu0 0.0
        %285 = vmatprep.subr.mxu0 0.0
        %286 = vmatpush1.msra.mxu0 0.0
        %287 = vmatprep.subr.mxu0 0.0
        %288 = vmatpush1.msra.mxu0 0.0
        %289 = vmatprep.subr.mxu0 0.0
        %290 = vmatpush1.msra.mxu0 0.0
        %291 = vmatprep.subr.mxu0 0.0
        %292 = vmatpush1.msra.mxu0 0.0
        %293 = vmatprep.subr.mxu0 0.0
        %294 = vmatpush1.msra.mxu0 0.0
        %295 = vmatprep.subr.mxu0 0.0
        %296 = vmatpush1.msra.mxu0 0.0
        %297 = vmatprep.subr.mxu0 0.0
        %298 = vmatpush1.msra.mxu0 0.0
        %299 = vmatprep.subr.mxu0 0.0
        %300 = vmatpush1.msra.mxu0 0.0
        %301 = vmatprep.subr.mxu0 0.0
        %302 = vmatpush1.msra.mxu0 0.0
        %303 = vmatprep.subr.mxu0 0.0
        %304 = vmatpush1.msra.mxu0 0.0
        %305 = vmatprep.subr.mxu0 0.0
        %306 = vmatpush1.msra.mxu0 0.0
        %307 = vmatprep.subr.mxu0 0.0
        %308 = vmatpush1.msra.mxu0 0.0
        %309 = vmatprep.subr.mxu0 0.0
        %310 = vmatpush1.msra.mxu0 0.0
        %311 = vmatprep.subr.mxu0 0.0
        %312 = vmatpush1.msra.mxu0 0.0
        %313 = vmatprep.subr.mxu0 0.0
        %314 = vmatpush1.msra.mxu0 0.0
        %315 = vmatprep.mubr.f32.mxu0 0.0
        %316 = vmatmul.mubr.f32.gmra.mrb[0].mxu0 %v249
        %v317 = vpop.f32.mrb[0].mxu0
        %v318 = vadd.f32 0.0, %v317
        %v319 = vpop.f32.mrb[0].mxu0
        %320 = vdwg.mxu0
        %v321 = vmax.f32 %v318, 0.0
        %v322 = vld [vmem:[%s2] sm:$0x3]
        %vm323 = vcmask 15360
        %v325 = vsel %vm323, %v321, 0
        %vm327 = vcmask 1041408
        %v329 = vsel %vm327, %v322, 0
        %331 = vmatprep.subr.mxu0 0.0
        %332 = vmatpush1.msra.mxu0 %v329
        %333 = vmatprep.subr.mxu0 0.0
        %334 = vmatpush1.msra.mxu0 0.0
        %335 = vmatprep.subr.mxu0 0.0
        %336 = vmatpush1.msra.mxu0 0.0
        %337 = vmatprep.subr.mxu0 0.0
        %338 = vmatpush1.msra.mxu0 0.0
        %339 = vmatprep.subr.mxu0 0.0
        %340 = vmatpush1.msra.mxu0 0.0
        %341 = vmatprep.subr.mxu0 0.0
        %342 = vmatpush1.msra.mxu0 0.0
        %343 = vmatprep.subr.mxu0 0.0
        %344 = vmatpush1.msra.mxu0 0.0
        %345 = vmatprep.subr.mxu0 0.0
        %346 = vmatpush1.msra.mxu0 0.0
        %347 = vmatprep.subr.mxu0 0.0
        %348 = vmatpush1.msra.mxu0 0.0
        %349 = vmatprep.subr.mxu0 0.0
        %350 = vmatpush1.msra.mxu0 0.0
        %351 = vmatprep.subr.mxu0 0.0
        %352 = vmatpush1.msra.mxu0 0.0
        %353 = vmatprep.subr.mxu0 0.0
        %354 = vmatpush1.msra.mxu0 0.0
        %355 = vmatprep.subr.mxu0 0.0
        %356 = vmatpush1.msra.mxu0 0.0
        %357 = vmatprep.subr.mxu0 0.0
        %358 = vmatpush1.msra.mxu0 0.0
        %359 = vmatprep.subr.mxu0 0.0
        %360 = vmatpush1.msra.mxu0 0.0
        %361 = vmatprep.subr.mxu0 0.0
        %362 = vmatpush1.msra.mxu0 0.0
        %363 = vmatprep.subr.mxu0 0.0
        %364 = vmatpush1.msra.mxu0 0.0
        %365 = vmatprep.subr.mxu0 0.0
        %366 = vmatpush1.msra.mxu0 0.0
        %367 = vmatprep.subr.mxu0 0.0
        %368 = vmatpush1.msra.mxu0 0.0
        %369 = vmatprep.subr.mxu0 0.0
        %370 = vmatpush1.msra.mxu0 0.0
        %371 = vmatprep.subr.mxu0 0.0
        %372 = vmatpush1.msra.mxu0 0.0
        %373 = vmatprep.subr.mxu0 0.0
        %374 = vmatpush1.msra.mxu0 0.0
        %375 = vmatprep.subr.mxu0 0.0
        %376 = vmatpush1.msra.mxu0 0.0
        %377 = vmatprep.subr.mxu0 0.0
        %378 = vmatpush1.msra.mxu0 0.0
        %379 = vmatprep.subr.mxu0 0.0
        %380 = vmatpush1.msra.mxu0 0.0
        %381 = vmatprep.subr.mxu0 0.0
        %382 = vmatpush1.msra.mxu0 0.0
        %383 = vmatprep.subr.mxu0 0.0
        %384 = vmatpush1.msra.mxu0 0.0
        %385 = vmatprep.subr.mxu0 0.0
        %386 = vmatpush1.msra.mxu0 0.0
        %387 = vmatprep.subr.mxu0 0.0
        %388 = vmatpush1.msra.mxu0 0.0
        %389 = vmatprep.subr.mxu0 0.0
        %390 = vmatpush1.msra.mxu0 0.0
        %391 = vmatprep.subr.mxu0 0.0
        %392 = vmatpush1.msra.mxu0 0.0
        %393 = vmatprep.subr.mxu0 0.0
        %394 = vmatpush1.msra.mxu0 0.0
        %395 = vmatprep.mubr.f32.mxu0 0.0
        %396 = vmatmul.mubr.f32.gmra.mrb[0].mxu0 %v325
        %v397 = vpop.f32.mrb[0].mxu0
        %v398 = vadd.f32 0.0, %v397
        %v399 = vpop.f32.mrb[0].mxu0
        %400 = vdwg.mxu0
        %v401 = vxor.u32 %v398, 2147483648
        %v402 = vmul.f32 %v401, 1.442695
        %v403 = vpow.pop %v402
        %v404 = vadd.f32 %v403, 1.0
        %v405 = vrcp.pop %v404
        %v406 = vmul.f32 1.0, %v405
        %v407 = vld [vmem:[%s166] sm:$0xff]
        %v408 = vld [vmem:[%s166 + $0x10] sm:$0xff]
        %v409 = vld [vmem:[%s166 + $0x20] sm:$0xff]
        %v410 = vld [vmem:[%s166 + $0x30] sm:$0xff]
        %v411 = vlaneseq
        %v412 = vshrl.u32 %v411, 7
        %v413 = vsub.s32 0, %v412
        %v414 = vrot.slane %v406, %v413
        %416 = vbcast.lane.b32.xlu0 %v414, 256
        %v417 = vpop.permute.xlu0 %416
        %s419 = sor.u32 256, 8
        %420 = vbcast.lane.b32.xlu0 %v414, %s419
        %v421 = vpop.permute.xlu0 %420
        %s423 = sor.u32 256, 16
        %424 = vbcast.lane.b32.xlu0 %v414, %s423
        %v425 = vpop.permute.xlu0 %424
        %s427 = sor.u32 256, 24
        %428 = vbcast.lane.b32.xlu0 %v414, %s427
        %v429 = vpop.permute.xlu0 %428
        %v430 = vmul.f32 %v407, %v417
        %v431 = vmul.f32 %v193, %v417
        %v432 = vmul.f32 %v408, %v421
        %v433 = vmul.f32 %v194, %v421
        %v434 = vmul.f32 %v409, %v425
        %v435 = vmul.f32 %v195, %v425
        %v436 = vmul.f32 %v410, %v429
        %v437 = vmul.f32 %v196, %v429
        %438 = vst [vmem:[%s188] sm:$0xff] %v430
        %439 = vst [vmem:[%s188 + $0x8] sm:$0xff] %v431
        %440 = vst [vmem:[%s188 + $0x10] sm:$0xff] %v432
        %441 = vst [vmem:[%s188 + $0x18] sm:$0xff] %v433
        %442 = vst [vmem:[%s188 + $0x20] sm:$0xff] %v434
        %443 = vst [vmem:[%s188 + $0x28] sm:$0xff] %v435
        %444 = vst [vmem:[%s188 + $0x30] sm:$0xff] %v436
        %445 = vst [vmem:[%s188 + $0x38] sm:$0xff] %v437
        %s446 = sand.u32 %s96, 1
        %s447 = scalar_lea.sflag [#allocation4], %s446
        %s448 = sand.u32 %s96, 1
        %s449 = smul.addr %s448, 64
        %s450 = scalar_lea.vmem [#allocation5], %s449
        // Predicated region
        $region37: #{tpu_custom_call.1} parent=31 // pred_check
          %p451 = pneg %p106
        $region38: #{tpu_custom_call.1} parent=31 // pred_check_branch
          %453 = sbr.rel (%p451) target = $region40
        $region39: #{tpu_custom_call.1} parent=31 // pred_region
          %s455 = ssub.s32 1024, 1024
          %456 = vsyncadd %s447, %s455
          %s457 = smul.addr %s20, 8
          %s458 = smul.addr %s457, 128
          %s459 = scalar_lea.hbm %s3, %s458
          %s460 = sshll.u32 %s450, 4
          %s461 = int_to_ptr.vmem [resolvable:$true] %s460
          %466 = dma.vmem_to_hbm [thread:$0]  %s461, 1024, %s459, %s447, 256, 256, 16
        $region40: #{tpu_custom_call.1} parent=31 // pred_fallthru
          _
      $region32: #{tpu_custom_call.1} parent=5 // pred_fallthru
        _
      %p467 = scmp.le.s32.totalorder 2, %s15
      // Predicated region
      $region41: #{tpu_custom_call.1} parent=5 // pred_check
        %p468 = pneg %p467
      $region42: #{tpu_custom_call.1} parent=5 // pred_check_branch
        %470 = sbr.rel (%p468) target = $region44
      $region43: #{tpu_custom_call.1} parent=5 // pred_region
        %s471 = ssub.s32 %s15, 2
        // Predicated region
        $region45: #{tpu_custom_call.1} parent=43 // pred_check
          %p472 = pneg %p112
        $region46: #{tpu_custom_call.1} parent=43 // pred_check_branch
          %474 = sbr.rel (%p472) target = $region48
        $region47: #{tpu_custom_call.1} parent=43 // pred_region
          %s475 = sand.u32 %s97, 1
          %s476 = scalar_lea.sflag [#allocation4], %s475
          %s477 = sand.u32 %s97, 1
          %s478 = smul.addr %s477, 64
          %s479 = scalar_lea.vmem [#allocation5], %s478
          %480 = dma.done %s476, 1024
        $region48: #{tpu_custom_call.1} parent=43 // pred_fallthru
          _
      $region44: #{tpu_custom_call.1} parent=5 // pred_fallthru
        _
    $region6: #{tpu_custom_call.1} parent=1 // loop_footer
      %s19 = sadd.s32 1, %s15
    $region7: #{tpu_custom_call.1} parent=1 // loop_footer_branch
      %14 = sbr.rel target = $region3
    $region8: #{tpu_custom_call.1} parent=1 // loop_exit
      _
    %481 = vsyncpa [#allocation3], 1
    %s482 = scalar_lea.sflag [#allocation3], 1
    %483 = vsyncpa %s482, 1
    %484 = vsyncpa [#allocation4], 1
    %s485 = scalar_lea.sflag [#allocation4], 1
    %486 = vsyncpa %s485, 1

</llo_original>
